<compile_context>
chip_gen: v7x
topology: tpu7x:2x2x1
jax: 0.10.0
libtpu: 0.0.40
codegen_flags: <defaults>
</compile_context>

<pallas_src>
import functools

import jax
import jax.numpy as jnp
from jax.experimental import pallas as pl
from jax.experimental.pallas import tpu as pltpu


def _round_up(x: int, m: int) -> int:
    return (x + m - 1) // m * m


def _cross_entropy_partial_kernel(logits_ref, tgt_ref, out_ref, acc_ref, *,
                                  n_rows, tile_n, tiles_per_split, chunk_c):
    """Accumulates sum over valid rows of (logsumexp(logits) - logits[target]).

    Grid: (split, batch_tile). The scratch accumulator relies on the batch-tile
    axis ("arbitrary") iterating innermost and contiguously for each split value
    (lexicographic grid order; per-core scratch under megacore sharding), so the
    t==0 init / t==last finalize bracket exactly one split's tiles.
    """
    s = pl.program_id(0)   # split index  ("parallel": maps to cores on v7x)
    t = pl.program_id(1)   # batch tile   ("arbitrary": reduction axis)

    @pl.when(t == 0)
    def _init():
        acc_ref[...] = jnp.zeros_like(acc_ref)

    tgt = tgt_ref[...]                                      # [tile_n, 1] int32
    c_total = logits_ref.shape[1]
    n_chunks = -(-c_total // chunk_c)

    # Online logsumexp over class-axis chunks: caps live f32 temporaries at
    # [tile_n, chunk_c] independent of C (keeps big batch tiles inside v7x's
    # 64 MiB VMEM); a single chunk degenerates to plain stable LSE.
    m = None
    sumexp = None
    tgt_logit = jnp.zeros((tile_n, 1), jnp.float32)

    for ci in range(n_chunks):
        c0 = ci * chunk_c
        c1 = min(c0 + chunk_c, c_total)
        w = c1 - c0
        raw = logits_ref[:, c0:c1]                          # native dtype [tile_n, w]

        # Target-logit select on the native-dtype chunk (exact: at most one hit
        # per row). Column iota is (1, w); the compare broadcasts it, so no
        # full-tile int32 temporary is materialized.
        col = jax.lax.broadcasted_iota(jnp.int32, (1, w), 1) + c0
        onehot = col == tgt                                 # [tile_n, w]
        sel = jnp.where(onehot, raw, 0)
        tgt_logit = tgt_logit + jnp.sum(
            sel, axis=-1, keepdims=True).astype(jnp.float32)

        # Upcast after the (possibly bf16) HBM->VMEM transfer.
        chunk = raw.astype(jnp.float32)
        cmax = jnp.max(chunk, axis=-1, keepdims=True)       # [tile_n, 1]
        if ci == 0:
            m = cmax
            sumexp = jnp.sum(jnp.exp(chunk - m), axis=-1, keepdims=True)
        else:
            new_m = jnp.maximum(m, cmax)
            sumexp = (sumexp * jnp.exp(m - new_m)
                      + jnp.sum(jnp.exp(chunk - new_m), axis=-1, keepdims=True))
            m = new_m

    per_example = m + jnp.log(sumexp) - tgt_logit           # = lse - target_logit

    # Row-validity mask: handles N % tile_n != 0 and clamped trailing tiles.
    # Any garbage/NaN produced by padded rows above is discarded by this select
    # (this is the ONLY masking pass; no full [tile_n, C] pre-mask is done).
    row = jax.lax.broadcasted_iota(jnp.int32, (tile_n, 1), 0)
    global_row = (s * tiles_per_split + t) * tile_n + row
    valid = global_row < n_rows
    per_example = jnp.where(valid, per_example, 0.0)

    acc_ref[...] += jnp.sum(per_example, keepdims=True)

    # Write this split's partial sum exactly once, at the last reduction step.
    @pl.when(t == pl.num_programs(1) - 1)
    def _finalize():
        out_ref[0] = acc_ref[...]


def _device_kind() -> str:
    try:
        return jax.devices()[0].device_kind.lower()
    except Exception:
        return ""


def _default_num_splits(kind: str) -> int:
    # v7x has 2 TensorCores per chip; split batch tiles across them.
    return 2 if ("v7" in kind or "7x" in kind) else 1


def classifier_loss(logits, target, *, tile_n=None, num_splits=None,
                    class_chunk=None):
    """JAX/Pallas equivalent of ClassifierLoss.forward.

    logits: [N, C] float array (any float dtype; transferred in native dtype)
    target: [N] int array of class indices (precondition: 0 <= target < C,
            as with torch.nn.CrossEntropyLoss)
    returns: {'cls': scalar float32 loss}
    """
    n, c = logits.shape
    itemsize = jnp.dtype(logits.dtype).itemsize
    kind = _device_kind()
    is_v7 = ("v7" in kind) or ("7x" in kind)

    # --- Per-generation VMEM / tiling policy ------------------------------
    # v7x: 64 MiB physical VMEM -> budget the f32 intermediates explicitly and
    # keep the scoped limit <= 40 MiB.  v5e/v6e: 128 MiB physical -> bigger
    # blocks, fewer grid steps (better fraction of HBM roofline).
    if is_v7:
        input_budget = 14 << 20        # double-buffered native-dtype blocks
        temps_budget = 16 << 20        # live f32 intermediates per step
        target_block_bytes = 2 << 20   # aim ~2 MiB logits block per step
        vmem_cap = 40 << 20
    else:
        input_budget = 40 << 20
        temps_budget = 32 << 20
        target_block_bytes = 4 << 20
        vmem_cap = 80 << 20

    # Class-axis chunk for the in-kernel online logsumexp.
    chunk_c = int(max(1, min(c, 2048 if class_chunk is None else class_chunk)))

    # Batch-tile size: grow toward the target block size but stay within the
    # (double-buffered) input budget and the f32-temporaries budget.
    row_in_bytes = c * itemsize + 512        # logits row + lane-padded i32 target row
    max_tile_in = max(8, (input_budget // (2 * row_in_bytes)) // 8 * 8)
    max_tile_tmp = max(8, (temps_budget // (12 * chunk_c)) // 8 * 8)
    tile_goal = max(8, (target_block_bytes // (c * itemsize)) // 8 * 8)
    if tile_n is None:
        tile_n = tile_goal
    tile_n = int(max(8, (min(tile_n, max_tile_in, max_tile_tmp,
                             _round_up(n, 8)) // 8) * 8))
    # TODO(synk): for vocab-scale C where even an (8, C) native-dtype block
    # overflows the input budget, also tile the class axis in the GRID (online
    # LSE carried across grid steps) instead of only inside the kernel.

    tiles_total = -(-n // tile_n)
    if num_splits is None:
        num_splits = _default_num_splits(kind)
    num_splits = max(1, min(int(num_splits), tiles_total))
    tiles_per_split = -(-tiles_total // num_splits)
    last_block = tiles_total - 1

    tgt_2d = target.astype(jnp.int32).reshape(n, 1)

    kernel = functools.partial(
        _cross_entropy_partial_kernel,
        n_rows=n, tile_n=tile_n, tiles_per_split=tiles_per_split,
        chunk_c=chunk_c)

    def row_block(s, t):
        # Clamp so the generated DMA never walks past the last (possibly
        # partial) batch tile; rows of clamped repeats are masked in-kernel.
        return (jnp.minimum(s * tiles_per_split + t, last_block), 0)

    block_bytes = tile_n * row_in_bytes
    temps_bytes = 12 * tile_n * chunk_c
    vmem_need = 2 * block_bytes + temps_bytes + (6 << 20)
    vmem_limit = int(min(max(vmem_need, 32 << 20), vmem_cap))

    # TODO(synk): verify on v7x (xprof) that the leading "parallel" axis shards
    # across both TensorCores; if not, switch to pltpu.CORE_PARALLEL or
    # pl.core_map.  On v5e/v6e, consider pipeline_mode=pl.Buffered(3) for the
    # logits spec only if step-boundary DMA gaps show up in the trace.
    partials = pl.pallas_call(
        kernel,
        out_shape=jax.ShapeDtypeStruct((num_splits, 1, 1), jnp.float32),
        grid_spec=pltpu.PrefetchScalarGridSpec(
            num_scalar_prefetch=0,
            grid=(num_splits, tiles_per_split),
            in_specs=[
                pl.BlockSpec((tile_n, c), row_block),
                pl.BlockSpec((tile_n, 1), row_block),
            ],
            out_specs=pl.BlockSpec((1, 1, 1), lambda s, t: (s, 0, 0)),
            scratch_shapes=[pltpu.VMEM((1, 1), jnp.float32)],
        ),
        compiler_params=pltpu.CompilerParams(
            dimension_semantics=("parallel", "arbitrary"),
            vmem_limit_bytes=vmem_limit,
        ),
    )(logits, tgt_2d)

    loss = jnp.sum(partials) / jnp.float32(n)
    return {"cls": loss}


if __name__ == "__main__":
    key = jax.random.PRNGKey(0)

    def ref_loss(lg, tg):
        lgf = lg.astype(jnp.float32)
        nn_ = lgf.shape[0]
        return jnp.mean(jax.nn.logsumexp(lgf, axis=-1) - lgf[jnp.arange(nn_), tg])

    k1, k2, k3, k4, k5, k6 = jax.random.split(key, 6)

    # Case 1: small f32 problem (single tile), matches the module's simple usage.
    N1, C1 = 8, 32
    logits1 = jax.random.normal(k1, (N1, C1), dtype=jnp.float32)
    target1 = jax.random.randint(k2, (N1,), 0, C1, dtype=jnp.int32)
    out1 = classifier_loss(logits1, target1)
    loss1 = jax.block_until_ready(out1["cls"])
    assert jnp.allclose(loss1, ref_loss(logits1, target1), rtol=1e-5, atol=1e-5), (
        loss1, ref_loss(logits1, target1))

    # Case 2: bf16 logits, N not a multiple of the tile, C not a multiple of 128
    # -> exercises multi-tile grid, edge masking, native-dtype HBM transfer.
    N2, C2 = 70, 257
    logits2 = jax.random.normal(k3, (N2, C2), dtype=jnp.float32).astype(jnp.bfloat16)
    target2 = jax.random.randint(k4, (N2,), 0, C2, dtype=jnp.int32)
    out2 = classifier_loss(logits2, target2, tile_n=16)
    loss2 = jax.block_until_ready(out2["cls"])
    assert jnp.allclose(loss2, ref_loss(logits2, target2), rtol=1e-4, atol=1e-4), (
        loss2, ref_loss(logits2, target2))

    # Case 3: force multiple class-axis chunks -> exercises the online logsumexp.
    N3, C3 = 24, 300
    logits3 = jax.random.normal(k5, (N3, C3), dtype=jnp.float32)
    target3 = jax.random.randint(k6, (N3,), 0, C3, dtype=jnp.int32)
    out3 = classifier_loss(logits3, target3, tile_n=8, class_chunk=128)
    loss3 = jax.block_until_ready(out3["cls"])
    assert jnp.allclose(loss3, ref_loss(logits3, target3), rtol=1e-5, atol=1e-5), (
        loss3, ref_loss(logits3, target3))

    print("KERNEL_OK")
</pallas_src>

<mosaic_0001>
module attributes {stable_mosaic.version = 11 : i64} {
  func.func @_cross_entropy_partial_kernel(%arg0: i32, %arg1: i32, %arg2: memref<8x32xf32, #tpu.memory_space<vmem>>, %arg3: memref<8x1xi32, #tpu.memory_space<vmem>>, %arg4: memref<1x1x1xf32, #tpu.memory_space<vmem>>, %arg5: memref<1x1xf32, #tpu.memory_space<vmem>>) attributes {dimension_semantics = [#tpu.dimension_semantics<parallel>, #tpu.dimension_semantics<arbitrary>], iteration_bounds = array<i64: 1, 1>, scalar_prefetch = 0 : i64, scratch_operands = 1 : i64, tpu.core_type = #tpu.core_type<tc>, window_params = [{transform_indices = @transform_0, window_bounds = array<i64: 8, 32>}, {transform_indices = @transform_1, window_bounds = array<i64: 8, 1>}, {transform_indices = @transform_2, window_bounds = array<i64: 1, 1, 1>}]} {
    %c0_i32 = arith.constant 0 : i32
    %0 = arith.cmpi eq, %arg1, %c0_i32 : i32
    %1 = arith.extui %0 : i1 to i32
    %c0_i32_0 = arith.constant 0 : i32
    %2 = arith.cmpi ne, %1, %c0_i32_0 : i32
    scf.if %2 {
      %cst_18 = arith.constant 0.000000e+00 : f32
      %49 = vector.broadcast %cst_18 : f32 to vector<1x1xf32>
      %c0_19 = arith.constant 0 : index
      %c0_20 = arith.constant 0 : index
      %50 = vector.load %arg5[%c0_19, %c0_20] : memref<1x1xf32, #tpu.memory_space<vmem>>, vector<1x1xf32>
      tpu.vector_store %arg5[%c0_19, %c0_20], %49 {strides = array<i32>} : memref<1x1xf32, #tpu.memory_space<vmem>>, vector<1x1xf32>,
    } else {
    }
    %c0 = arith.constant 0 : index
    %c0_1 = arith.constant 0 : index
    %3 = vector.load %arg3[%c0, %c0_1] : memref<8x1xi32, #tpu.memory_space<vmem>>, vector<8x1xi32>
    %cst = arith.constant 0.000000e+00 : f32
    %4 = vector.broadcast %cst : f32 to vector<8x1xf32>
    %c0_2 = arith.constant 0 : index
    %c0_3 = arith.constant 0 : index
    %5 = vector.load %arg2[%c0_2, %c0_3] : memref<8x32xf32, #tpu.memory_space<vmem>>, vector<8x32xf32>
    %6 = tpu.iota {dimensions = array<i32: 1>} : vector<1x32xi32>
    %c0_i32_4 = arith.constant 0 : i32
    %7 = vector.broadcast %c0_i32_4 : i32 to vector<1x32xi32>
    %8 = arith.addi %6, %7 : vector<1x32xi32>
    %9 = vector.broadcast %8 : vector<1x32xi32> to vector<8x32xi32>
    %10 = vector.broadcast %3 : vector<8x1xi32> to vector<8x32xi32>
    %11 = arith.cmpi eq, %9, %10 : vector<8x32xi32>
    %c0_i32_5 = arith.constant 0 : i32
    %12 = arith.sitofp %c0_i32_5 : i32 to f32
    %13 = vector.broadcast %12 : f32 to vector<8x32xf32>
    %14 = arith.select %11, %5, %13 : vector<8x32xi1>, vector<8x32xf32>
    %cst_6 = arith.constant dense<0.000000e+00> : vector<8xf32>
    %15 = vector.multi_reduction <add>, %14, %cst_6 [1] : vector<8x32xf32> to vector<8xf32>
    %16 = vector.shape_cast %15 : vector<8xf32> to vector<8x1xf32>
    %17 = arith.addf %4, %16 : vector<8x1xf32>
    %cst_7 = arith.constant dense<0xFF800000> : vector<8xf32>
    %18 = vector.multi_reduction <maximumf>, %5, %cst_7 [1] : vector<8x32xf32> to vector<8xf32>
    %19 = vector.shape_cast %18 : vector<8xf32> to vector<8x1xf32>
    %20 = vector.broadcast %19 : vector<8x1xf32> to vector<8x32xf32>
    %21 = arith.subf %5, %20 : vector<8x32xf32>
    %22 = math.exp %21 : vector<8x32xf32>
    %cst_8 = arith.constant dense<0.000000e+00> : vector<8xf32>
    %23 = vector.multi_reduction <add>, %22, %cst_8 [1] : vector<8x32xf32> to vector<8xf32>
    %24 = vector.shape_cast %23 : vector<8xf32> to vector<8x1xf32>
    %25 = math.log %24 : vector<8x1xf32>
    %26 = arith.addf %19, %25 : vector<8x1xf32>
    %27 = arith.subf %26, %17 : vector<8x1xf32>
    %28 = tpu.iota {dimensions = array<i32: 0>} : vector<8x1xi32>
    %c1_i32 = arith.constant 1 : i32
    %29 = arith.muli %arg0, %c1_i32 : i32
    %30 = arith.addi %29, %arg1 : i32
    %c8_i32 = arith.constant 8 : i32
    %31 = arith.muli %30, %c8_i32 : i32
    %32 = vector.broadcast %31 : i32 to vector<8x1xi32>
    %33 = arith.addi %32, %28 : vector<8x1xi32>
    %c8_i32_9 = arith.constant 8 : i32
    %34 = vector.broadcast %c8_i32_9 : i32 to vector<8x1xi32>
    %35 = arith.cmpi slt, %33, %34 : vector<8x1xi32>
    %cst_10 = arith.constant 0.000000e+00 : f32
    %36 = vector.broadcast %cst_10 : f32 to vector<8x1xf32>
    %37 = arith.select %35, %27, %36 : vector<8x1xi1>, vector<8x1xf32>
    %c0_11 = arith.constant 0 : index
    %c0_12 = arith.constant 0 : index
    %38 = vector.load %arg5[%c0_11, %c0_12] : memref<1x1xf32, #tpu.memory_space<vmem>>, vector<1x1xf32>
    %39 = vector.shape_cast %37 : vector<8x1xf32> to vector<1x8x1xf32>
    %cst_13 = arith.constant dense<0.000000e+00> : vector<1xf32>
    %40 = vector.multi_reduction <add>, %39, %cst_13 [1, 2] : vector<1x8x1xf32> to vector<1xf32>
    %41 = vector.shape_cast %40 : vector<1xf32> to vector<1x1x1xf32>
    %42 = vector.extract %41[0, 0, 0] : f32 from vector<1x1x1xf32>
    %43 = vector.broadcast %42 : f32 to vector<1x1xf32>
    %44 = arith.addf %38, %43 : vector<1x1xf32>
    %c0_14 = arith.constant 0 : index
    %c0_15 = arith.constant 0 : index
    %45 = vector.load %arg5[%c0_14, %c0_15] : memref<1x1xf32, #tpu.memory_space<vmem>>, vector<1x1xf32>
    tpu.vector_store %arg5[%c0_14, %c0_15], %44 {strides = array<i32>} : memref<1x1xf32, #tpu.memory_space<vmem>>, vector<1x1xf32>,
    %c0_i32_16 = arith.constant 0 : i32
    %46 = arith.cmpi eq, %arg1, %c0_i32_16 : i32
    %47 = arith.extui %46 : i1 to i32
    %c0_i32_17 = arith.constant 0 : i32
    %48 = arith.cmpi ne, %47, %c0_i32_17 : i32
    scf.if %48 {
      %c0_18 = arith.constant 0 : index
      %c0_19 = arith.constant 0 : index
      %49 = vector.load %arg5[%c0_18, %c0_19] : memref<1x1xf32, #tpu.memory_space<vmem>>, vector<1x1xf32>
      %c0_20 = arith.constant 0 : index
      %c0_21 = arith.constant 0 : index
      %c0_22 = arith.constant 0 : index
      %50 = vector.load %arg4[%c0_20, %c0_21, %c0_22] : memref<1x1x1xf32, #tpu.memory_space<vmem>>, vector<1x1x1xf32>
      %51 = vector.shape_cast %50 : vector<1x1x1xf32> to vector<1x1xf32>
      %52 = vector.shape_cast %49 : vector<1x1xf32> to vector<1x1x1xf32>
      tpu.vector_store %arg4[%c0_20, %c0_21, %c0_22], %52 {strides = array<i32>} : memref<1x1x1xf32, #tpu.memory_space<vmem>>, vector<1x1x1xf32>,
    } else {
    }
    return
  }
  func.func @transform_0(%arg0: i32, %arg1: i32) -> (i32, i32) {
    %c1_i32 = arith.constant 1 : i32
    %0 = arith.muli %arg0, %c1_i32 : i32
    %1 = arith.addi %0, %arg1 : i32
    %c0_i32 = arith.constant 0 : i32
    %2 = arith.minsi %1, %c0_i32 : i32
    %c0_i32_0 = arith.constant 0 : i32
    %c0_i32_1 = arith.constant 0 : i32
    return %2, %c0_i32_0 : i32, i32
  }
  func.func @transform_1(%arg0: i32, %arg1: i32) -> (i32, i32) {
    %c1_i32 = arith.constant 1 : i32
    %0 = arith.muli %arg0, %c1_i32 : i32
    %1 = arith.addi %0, %arg1 : i32
    %c0_i32 = arith.constant 0 : i32
    %2 = arith.minsi %1, %c0_i32 : i32
    %c0_i32_0 = arith.constant 0 : i32
    %c0_i32_1 = arith.constant 0 : i32
    return %2, %c0_i32_0 : i32, i32
  }
  func.func @transform_2(%arg0: i32, %arg1: i32) -> (i32, i32, i32) {
    %c0_i32 = arith.constant 0 : i32
    %c0_i32_0 = arith.constant 0 : i32
    %c0_i32_1 = arith.constant 0 : i32
    return %arg0, %c0_i32, %c0_i32_0 : i32, i32, i32
  }
}

</mosaic_0001>

<llo_original>
// kernel: tpu_custom_call.1
$region0: #{tpu_custom_call.1}
  #allocation0 [shape = 'u32[]', space=smem, size = 0x4, offset = 0x4, fixed_abs, tag = 'smem constant byte address 0x4 - core index']
  #allocation1 [shape = 'u32[144,128]{1,0:T(1,128)}', space=vmem, size = 0x12000, scoped, tag = 'internal scratch']
  #allocation2 [shape = 'f32[1,1]{1,0:T(1,128)}', space=vmem, size = 0x200, scoped, tag = 'scratch operand']
  %s0 = inlined_call_operand.vmem [shape: f32[8,32], index: 0, kind: input, shape index: {}]
  %s1 = inlined_call_operand.vmem [shape: s32[8,1], index: 1, kind: input, shape index: {}]
  %s2 = inlined_call_operand.hbm [shape: f32[1,1,1], index: 2, kind: output, shape index: {}]
  %s3 = sld [smem:[#allocation0]]
  $region26: #{tpu_custom_call.1} parent=0
    _
  %s5 = ssub.s32 1, %s3
  %s6 = scalar_select 0, %s5, %s3
  $region1: #{tpu_custom_call.1} parent=0
    #allocation3 [shape = 'u8[512]{0}', space=vmem, size = 0x400, scoped, tag = 'output window, operand 0, single buffered']
    #allocation4 [shape = 's32[1]{0}', space=sflag, size = 0x4, scoped, tag = 'scoped memory for tpu_custom_call.1']
    %7 = vsyncpa [#allocation4], 0
    // Predicated region
    $region2: #{tpu_custom_call.1} parent=1 // pred_check
      _
    $region3: #{tpu_custom_call.1} parent=1 // pred_check_branch
      %9 = sbr.rel (0) target = $region5
    $region4: #{tpu_custom_call.1} parent=1 // pred_region
      %s10 = sadd.s32 0, 0
      %p11 = scmp.lt.s32.totalorder %s10, 0
      %s12 = scalar_select %p11, %s10, 0
      %p13 = scmp.lt.s32.totalorder %s12, 0
      %s14 = scalar_select %p13, %s12, 0
      %s15 = smul.addr %s14, 8
      %s16 = scalar_lea.vmem %s0, %s15
      %s17 = sadd.s32 0, 0
      %p18 = scmp.lt.s32.totalorder %s17, 0
      %s19 = scalar_select %p18, %s17, 0
    $region5: #{tpu_custom_call.1} parent=1 // pred_fallthru
      _
    // Predicated region
    $region6: #{tpu_custom_call.1} parent=1 // pred_check
      _
    $region7: #{tpu_custom_call.1} parent=1 // pred_check_branch
      %21 = sbr.rel (0) target = $region9
    $region8: #{tpu_custom_call.1} parent=1 // pred_region
      %s22 = sadd.s32 0, 0
      %p23 = scmp.lt.s32.totalorder %s22, 0
      %s24 = scalar_select %p23, %s22, 0
      %p25 = scmp.lt.s32.totalorder %s24, 0
      %s26 = scalar_select %p25, %s24, 0
      %s27 = smul.addr %s26, 8
      %s28 = scalar_lea.vmem %s1, %s27
      %s29 = sadd.s32 0, 0
      %p30 = scmp.lt.s32.totalorder %s29, 0
      %s31 = scalar_select %p30, %s29, 0
    $region9: #{tpu_custom_call.1} parent=1 // pred_fallthru
      _
    %s32 = sadd.s32 0, 0
    %p33 = scmp.lt.s32.totalorder %s32, 0
    %s34 = scalar_select %p33, %s32, 0
    %p35 = scmp.lt.s32.totalorder %s34, 0
    %s36 = scalar_select %p35, %s34, 0
    %s37 = smul.addr %s36, 8
    %s38 = scalar_lea.vmem %s0, %s37
    %s39 = sadd.s32 0, 0
    %p40 = scmp.lt.s32.totalorder %s39, 0
    %s41 = scalar_select %p40, %s39, 0
    %p42 = scmp.lt.s32.totalorder %s41, 0
    %s43 = scalar_select %p42, %s41, 0
    %s44 = smul.addr %s43, 8
    %s45 = scalar_lea.vmem %s1, %s44
    %s46 = sadd.s32 0, 0
    %p47 = scmp.lt.s32.totalorder %s46, 0
    %s48 = scalar_select %p47, %s46, 0
    %p49 = scmp.lt.s32.totalorder %s48, 0
    %s50 = scalar_select %p49, %s48, 0
    %s51 = smul.addr %s50, 8
    %s52 = scalar_lea.vmem %s0, %s51
    %s53 = sadd.s32 0, 0
    %p54 = scmp.lt.s32.totalorder %s53, 0
    %s55 = scalar_select %p54, %s53, 0
    %s56 = sadd.s32 0, 0
    %p57 = scmp.lt.s32.totalorder %s56, 0
    %s58 = scalar_select %p57, %s56, 0
    %p59 = scmp.lt.s32.totalorder %s58, 0
    %s60 = scalar_select %p59, %s58, 0
    %s61 = smul.addr %s60, 8
    %s62 = scalar_lea.vmem %s1, %s61
    %s63 = sadd.s32 0, 0
    %p64 = scmp.lt.s32.totalorder %s63, 0
    %s65 = scalar_select %p64, %s63, 0
    %p66 = scmp.eq.s32.totalorder 0, 0
    // Predicated region
    $region10: #{tpu_custom_call.1} parent=1 // pred_check
      %p67 = pneg %p66
    $region11: #{tpu_custom_call.1} parent=1 // pred_check_branch
      %69 = sbr.rel (%p67) target = $region13
    $region12: #{tpu_custom_call.1} parent=1 // pred_region
      %vm70 = vcmask 0
      %71 = vst.msk [vmem:[#allocation2] sm:$0x1] %vm70, 0.0
    $region13: #{tpu_custom_call.1} parent=1 // pred_fallthru
      _
    %v72 = vld [vmem:[%s62] sm:$0xff]
    %v73 = vld [vmem:[%s52] sm:$0xff]
    %v74 = vlaneseq
    %v75 = vand.u32 %v74, 127
    %76 = vset.pattern.permute.xlu0 0
    %77 = vperm.xlu0 %76, %v72
    %v78 = vpop.permute.xlu0 %77
    %vm79 = vcmp.eq.s32.totalorder %v75, %v78
    %v80 = vsel %vm79, %v73, 0.0
    %vm81 = vcmask 261120
    %v82 = vsel %vm81, %v80, 0.0
    %83 = vadd.xlane.f32.xlu0 %v82
    %v84 = vpop.xlane.xlu0 %83
    %v85 = vadd.f32 %v84, 0.0
    %v86 = vsel %vm81, %v73, -inf
    %87 = vmax.xlane.f32.xlu0 %v86
    %v88 = vpop.xlane.xlu0 %87
    %v89 = vsub.f32 %v73, %v88
    %v90 = vmul.f32 %v89, 1.442695
    %v91 = vpow.pop %v90
    %v92 = vsel %vm81, %v91, 0.0
    %93 = vadd.xlane.f32.xlu0 %v92
    %v94 = vpop.xlane.xlu0 %93
    %v95 = vlog2.pop %v94
    %v96 = vmul.f32 %v95, 0.6931472
    %v97 = vadd.f32 %v88, %v96
    %v98 = vsub.f32 %v97, %v85
    %v99 = vlaneseq
    %v100 = vshrl.u32 %v99, 7
    %s101 = sadd.s32 0, 0
    %s102 = smul.u32 %s101, 8
    %v103 = vstv %s102
    %v104 = vadd.s32 %v103, %v100
    %vm105 = vcmp.lt.s32.totalorder %v104, 8
    %v106 = vsel %vm105, %v98, 0.0
    %v107 = vld [vmem:[#allocation2] sm:$0x1]
    %vm108 = vcmask 7168
    %v109 = vsel %vm108, %v106, 0.0
    %110 = vadd.xlane.f32.xlu0 %v109
    %v111 = vpop.xlane.xlu0 %110
    %v112 = vrot.slane %v111, 4
    %v113 = vadd.f32 %v111, %v112
    %v114 = vrot.slane %v113, 2
    %v115 = vadd.f32 %v113, %v114
    %v116 = vrot.slane %v115, 1
    %v117 = vadd.f32 %v115, %v116
    %s118 = vtos %v117
    %v119 = vstv %s118
    %v120 = vadd.f32 %v107, %v119
    %vm121 = vcmask 0
    %122 = vst.msk [vmem:[#allocation2] sm:$0x1] %vm121, %v120
    // Predicated region
    $region14: #{tpu_custom_call.1} parent=1 // pred_check
      %p123 = pneg %p66
    $region15: #{tpu_custom_call.1} parent=1 // pred_check_branch
      %125 = sbr.rel (%p123) target = $region17
    $region16: #{tpu_custom_call.1} parent=1 // pred_region
      %v126 = vld [vmem:[#allocation2] sm:$0x1]
      %127 = vst.msk [vmem:[#allocation3] sm:$0x1] %vm121, %v126
    $region17: #{tpu_custom_call.1} parent=1 // pred_fallthru
      _
    // Predicated region
    $region18: #{tpu_custom_call.1} parent=1 // pred_check
      _
    $region19: #{tpu_custom_call.1} parent=1 // pred_check_branch
      %129 = sbr.rel (0) target = $region21
    $region20: #{tpu_custom_call.1} parent=1 // pred_region
      %s131 = ssub.s32 16, 16
      %132 = vsyncadd [#allocation4], %s131
      %s134 = sshll.u32 [#allocation3], 4
      %s135 = int_to_ptr.vmem [resolvable:$true] %s134
      %137 = dma.vmem_to_hbm [thread:$0]  %s135, 16, %s2, [#allocation4]
    $region21: #{tpu_custom_call.1} parent=1 // pred_fallthru
      _
    // Predicated region
    $region22: #{tpu_custom_call.1} parent=1 // pred_check
      _
    $region23: #{tpu_custom_call.1} parent=1 // pred_check_branch
      %139 = sbr.rel (0) target = $region25
    $region24: #{tpu_custom_call.1} parent=1 // pred_region
      %140 = dma.done [#allocation4], 16
    $region25: #{tpu_custom_call.1} parent=1 // pred_fallthru
      _
    %141 = vsyncpa [#allocation4], 1

</llo_original>
